<compile_context>
chip_gen: v7x
topology: tpu7x:2x2x1
jax: 0.10.0
libtpu: 0.0.40
codegen_flags: <defaults>
</compile_context>

<pallas_src>
import numpy as np

import jax
import jax.numpy as jnp
from jax.experimental import pallas as pl
from jax.experimental.pallas import tpu as pltpu

# ---- small synthetic hyper-parameters (stand-ins for distilbert V/D, Co=100) ----
B = 32           # batch (grid of 4 -> >=2 pipelined steps per v7x TensorCore)
B_TILE = 8       # batch tile; multiple of 8 keeps every block (8,128)-legal
L = 16           # sequence length
V = 50           # vocab size (synthetic, stands in for 30522)
D = 32           # embedding / hidden size (stands in for 768)
Co = 16          # conv output channels (stands in for 100)
KS = (3, 4, 5)   # kernel heights
C = 4            # class_num

K_MAX = max(KS)                                  # 5 taps cover every branch
NCH = len(KS) * Co                               # concatenated conv channels (48)
NCH_PAD = ((NCH + 127) // 128) * 128             # pad conv-channel lane axis (128)
C_PAD = 128                                      # lane-dense output width


def _cnn_text_kernel(emb_ref, w_ref, b_ref, mask_ref, wf_ref, bf_ref, out_ref):
    bt, l, d = emb_ref.shape
    nch = w_ref.shape[1]
    n = bt * l

    # LHS loaded & flattened once (free relayout: l is a multiple of the bf16
    # sublane tile).  It is identical for every tap -- only the weight slice
    # and the output alignment change.
    x = emb_ref[...].reshape(n, d)                                # bf16

    # K_MAX accumulating MXU matmuls (no im2col slab).  Tap k must contribute
    # emb[b, t+k] @ W_k to output row (b, t), i.e. roll(X @ W_k, N - k) on the
    # flat row axis.  Wrapped rows (incl. across batch elements) only reach
    # time positions that the validity mask zeroes, and unused taps of shorter
    # branches hit all-zero weight columns, so the accumulation is exact.
    acc = jnp.dot(x, w_ref[0:d, :], preferred_element_type=jnp.float32)
    for k in range(1, K_MAX):
        y = jnp.dot(x, w_ref[k * d:(k + 1) * d, :],
                    preferred_element_type=jnp.float32)
        acc = acc + pltpu.roll(y, shift=n - k, axis=0)            # XLU rotate

    conv = acc.reshape(bt, l, nch)                                # free view

    # bias + ReLU (VPU); zero invalid time rows / padded channels (safe after
    # ReLU since valid activations are >= 0); max-pool over time (XLU reduce).
    act = jnp.maximum(conv + b_ref[...], 0.0) * mask_ref[...]
    hidden = jnp.max(act, axis=1)                                 # (bt, NCH_PAD)

    # Dropout(0.3) is identity in eval mode.
    # Classifier into a lane-dense 128-wide block; real logits are cols [:C],
    # padded rows/cols of wf/bf are zero so they contribute nothing.
    out_ref[...] = (jnp.dot(hidden, wf_ref[...],
                            preferred_element_type=jnp.float32)
                    + bf_ref[...]).astype(out_ref.dtype)


def pack_params(conv_ws, conv_bs, wf, bf):
    """One-time packing of per-branch conv / classifier params (host numpy)."""
    w_all = np.zeros((K_MAX * D, NCH_PAD), np.float32)
    bias_all = np.zeros((1, NCH_PAD), np.float32)
    mask = np.zeros((1, L, NCH_PAD), np.float32)
    for br, (K, w, b) in enumerate(zip(KS, conv_ws, conv_bs)):
        w_np = np.asarray(w)                                      # (K, D, Co)
        for k in range(K):
            w_all[k * D:(k + 1) * D, br * Co:(br + 1) * Co] = w_np[k]
        bias_all[0, br * Co:(br + 1) * Co] = np.asarray(b)[0]
        mask[0, :L - K + 1, br * Co:(br + 1) * Co] = 1.0          # valid time rows
    wf_pad = np.zeros((NCH_PAD, C_PAD), np.float32)
    wf_pad[:NCH, :C] = np.asarray(wf)
    bf_pad = np.zeros((1, C_PAD), np.float32)
    bf_pad[:, :C] = np.asarray(bf)
    return (jnp.asarray(w_all, dtype=jnp.bfloat16),
            jnp.asarray(bias_all), jnp.asarray(mask),
            jnp.asarray(wf_pad), jnp.asarray(bf_pad))


@jax.jit
def cnn_text_forward(token_ids, embed_table, w_all, bias_all, mask, wf_pad, bf_pad):
    """token_ids: (B, L) int32.  Returns logits (B, C)."""
    # Embedding lookup (frozen pretrained embedding in the torch module).
    # TODO(synk): fuse this gather into the kernel (scalar-prefetch token_ids
    # + per-row DMA from the HBM embedding table) to drop one HBM round trip.
    emb = embed_table[token_ids].astype(jnp.bfloat16)             # (B, L, D)

    single = pl.Buffered(1)   # grid-invariant operands: single-buffered
    logits_pad = pl.pallas_call(
        _cnn_text_kernel,
        out_shape=jax.ShapeDtypeStruct((B, C_PAD), jnp.float32),
        grid_spec=pltpu.PrefetchScalarGridSpec(
            num_scalar_prefetch=0,
            grid=(B // B_TILE,),
            in_specs=[
                # emb: auto-pipelined (double-buffered) over the batch grid
                pl.BlockSpec((B_TILE, L, D), lambda i: (i, 0, 0)),
                # packed conv weights / bias / mask / classifier: resident
                pl.BlockSpec((K_MAX * D, NCH_PAD), lambda i: (0, 0),
                             pipeline_mode=single),
                pl.BlockSpec((1, NCH_PAD), lambda i: (0, 0),
                             pipeline_mode=single),
                pl.BlockSpec((1, L, NCH_PAD), lambda i: (0, 0, 0),
                             pipeline_mode=single),
                pl.BlockSpec((NCH_PAD, C_PAD), lambda i: (0, 0),
                             pipeline_mode=single),
                pl.BlockSpec((1, C_PAD), lambda i: (0, 0),
                             pipeline_mode=single),
            ],
            out_specs=pl.BlockSpec((B_TILE, C_PAD), lambda i: (i, 0)),
        ),
        compiler_params=pltpu.CompilerParams(
            dimension_semantics=("parallel",),       # shard batch over v7x's 2 TCs
            vmem_limit_bytes=48 * 1024 * 1024,       # safe on v7x; raise on v5e/v6e
        ),
    )(emb, w_all, bias_all, mask, wf_pad, bf_pad)
    # logit.reshape(-1, class_num) in torch; drop the lane padding.
    return logits_pad[:, :C].reshape(-1, C)


def _reference_forward(token_ids, embed_table, conv_ws, conv_bs, wf, bf):
    # Mirrors the kernel's bf16 input precision (f32 accumulation).
    emb = embed_table[token_ids].astype(jnp.bfloat16).astype(jnp.float32)
    feats = []
    for K, w, b in zip(KS, conv_ws, conv_bs):
        w32 = w.astype(jnp.bfloat16).astype(jnp.float32)
        l_out = L - K + 1
        acc = jnp.zeros((B, l_out, Co), jnp.float32)
        for k in range(K):
            acc = acc + jnp.einsum('bld,dc->blc', emb[:, k:k + l_out, :], w32[k])
        acc = jnp.maximum(acc + b[None, :, :], 0.0)
        feats.append(jnp.max(acc, axis=1))
    hidden = jnp.concatenate(feats, axis=1)
    return hidden @ wf + bf


if __name__ == "__main__":
    key = jax.random.PRNGKey(0)
    k_tok, k_emb, k_w, k_b, k_wf, k_bf = jax.random.split(key, 6)

    token_ids = jax.random.randint(k_tok, (B, L), 0, V, dtype=jnp.int32)
    # TODO(synk): the real module loads frozen DistilBERT input embeddings; a
    # synthetic table stands in since no network/files are allowed here.
    embed_table = jax.random.normal(k_emb, (V, D), dtype=jnp.float32) * 0.1

    conv_ws, conv_bs = [], []
    wkeys = jax.random.split(k_w, len(KS))
    bkeys = jax.random.split(k_b, len(KS))
    for K, wk, bk in zip(KS, wkeys, bkeys):
        conv_ws.append(jax.random.normal(wk, (K, D, Co), dtype=jnp.float32)
                       * (1.0 / (K * D) ** 0.5))
        conv_bs.append(jax.random.normal(bk, (1, Co), dtype=jnp.float32) * 0.01)

    wf = jax.random.normal(k_wf, (NCH, C), dtype=jnp.float32) * (1.0 / NCH ** 0.5)
    bf = jax.random.normal(k_bf, (1, C), dtype=jnp.float32) * 0.01

    # Pack once at "model init" (hoisted off the per-call path).
    packed = pack_params(conv_ws, conv_bs, wf, bf)

    out = cnn_text_forward(token_ids, embed_table, *packed)
    out = jax.block_until_ready(out)

    ref = _reference_forward(token_ids, embed_table, conv_ws, conv_bs, wf, bf)
    assert out.shape == (B, C)
    assert jnp.allclose(out, ref, atol=2e-3, rtol=2e-3), "mismatch vs reference"

    # TODO(synk): CrossEntropyLoss members, training-mode dropout and the
    # return_h path are not part of the eval forward hot path and are omitted.
    print("KERNEL_OK")
</pallas_src>

<mosaic_0001>
module attributes {stable_mosaic.version = 11 : i64} {
  func.func @_cnn_text_kernel(%arg0: i32, %arg1: memref<8x16x32xbf16, #tpu.memory_space<vmem>>, %arg2: memref<160x128xbf16, #tpu.memory_space<vmem>>, %arg3: memref<1x128xf32, #tpu.memory_space<vmem>>, %arg4: memref<1x16x128xf32, #tpu.memory_space<vmem>>, %arg5: memref<128x128xf32, #tpu.memory_space<vmem>>, %arg6: memref<1x128xf32, #tpu.memory_space<vmem>>, %arg7: memref<8x128xf32, #tpu.memory_space<vmem>>) attributes {dimension_semantics = [#tpu.dimension_semantics<parallel>], iteration_bounds = array<i64: 4>, scalar_prefetch = 0 : i64, scratch_operands = 0 : i64, tpu.core_type = #tpu.core_type<tc>, window_params = [{transform_indices = @transform_0, window_bounds = array<i64: 8, 16, 32>}, {pipeline_mode = #tpu.pipeline_mode<synchronous>, transform_indices = @transform_1, window_bounds = array<i64: 160, 128>}, {pipeline_mode = #tpu.pipeline_mode<synchronous>, transform_indices = @transform_2, window_bounds = array<i64: 1, 128>}, {pipeline_mode = #tpu.pipeline_mode<synchronous>, transform_indices = @transform_3, window_bounds = array<i64: 1, 16, 128>}, {pipeline_mode = #tpu.pipeline_mode<synchronous>, transform_indices = @transform_4, window_bounds = array<i64: 128, 128>}, {pipeline_mode = #tpu.pipeline_mode<synchronous>, transform_indices = @transform_5, window_bounds = array<i64: 1, 128>}, {transform_indices = @transform_6, window_bounds = array<i64: 8, 128>}]} {
    %c0 = arith.constant 0 : index
    %c0_0 = arith.constant 0 : index
    %c0_1 = arith.constant 0 : index
    %0 = vector.load %arg1[%c0, %c0_0, %c0_1] : memref<8x16x32xbf16, #tpu.memory_space<vmem>>, vector<8x16x32xbf16>
    %1 = vector.shape_cast %0 : vector<8x16x32xbf16> to vector<128x32xbf16>
    %c0_2 = arith.constant 0 : index
    %c0_3 = arith.constant 0 : index
    %2 = vector.load %arg2[%c0_2, %c0_3] : memref<160x128xbf16, #tpu.memory_space<vmem>>, vector<32x128xbf16>
    %cst = arith.constant dense<0.000000e+00> : vector<128x128xf32>
    %3 = tpu.matmul %1, %2, %cst {dimension_numbers = #tpu.dot_dimension_numbers<[1], [0], [0], [1], [0, 0, 1, 1], [], []>} : vector<128x32xbf16>, vector<32x128xbf16>, vector<128x128xf32> -> vector<128x128xf32>
    %c32 = arith.constant 32 : index
    %c0_4 = arith.constant 0 : index
    %4 = vector.load %arg2[%c32, %c0_4] : memref<160x128xbf16, #tpu.memory_space<vmem>>, vector<32x128xbf16>
    %cst_5 = arith.constant dense<0.000000e+00> : vector<128x128xf32>
    %5 = tpu.matmul %1, %4, %cst_5 {dimension_numbers = #tpu.dot_dimension_numbers<[1], [0], [0], [1], [0, 0, 1, 1], [], []>} : vector<128x32xbf16>, vector<32x128xbf16>, vector<128x128xf32> -> vector<128x128xf32>
    %c127_i32 = arith.constant 127 : i32
    %6 = tpu.dynamic_rotate %5 by %c127_i32 dim 0 : vector<128x128xf32>, i32 -> vector<128x128xf32>
    %7 = arith.addf %3, %6 : vector<128x128xf32>
    %c64 = arith.constant 64 : index
    %c0_6 = arith.constant 0 : index
    %8 = vector.load %arg2[%c64, %c0_6] : memref<160x128xbf16, #tpu.memory_space<vmem>>, vector<32x128xbf16>
    %cst_7 = arith.constant dense<0.000000e+00> : vector<128x128xf32>
    %9 = tpu.matmul %1, %8, %cst_7 {dimension_numbers = #tpu.dot_dimension_numbers<[1], [0], [0], [1], [0, 0, 1, 1], [], []>} : vector<128x32xbf16>, vector<32x128xbf16>, vector<128x128xf32> -> vector<128x128xf32>
    %c126_i32 = arith.constant 126 : i32
    %10 = tpu.dynamic_rotate %9 by %c126_i32 dim 0 : vector<128x128xf32>, i32 -> vector<128x128xf32>
    %11 = arith.addf %7, %10 : vector<128x128xf32>
    %c96 = arith.constant 96 : index
    %c0_8 = arith.constant 0 : index
    %12 = vector.load %arg2[%c96, %c0_8] : memref<160x128xbf16, #tpu.memory_space<vmem>>, vector<32x128xbf16>
    %cst_9 = arith.constant dense<0.000000e+00> : vector<128x128xf32>
    %13 = tpu.matmul %1, %12, %cst_9 {dimension_numbers = #tpu.dot_dimension_numbers<[1], [0], [0], [1], [0, 0, 1, 1], [], []>} : vector<128x32xbf16>, vector<32x128xbf16>, vector<128x128xf32> -> vector<128x128xf32>
    %c125_i32 = arith.constant 125 : i32
    %14 = tpu.dynamic_rotate %13 by %c125_i32 dim 0 : vector<128x128xf32>, i32 -> vector<128x128xf32>
    %15 = arith.addf %11, %14 : vector<128x128xf32>
    %c128 = arith.constant 128 : index
    %c0_10 = arith.constant 0 : index
    %16 = vector.load %arg2[%c128, %c0_10] : memref<160x128xbf16, #tpu.memory_space<vmem>>, vector<32x128xbf16>
    %cst_11 = arith.constant dense<0.000000e+00> : vector<128x128xf32>
    %17 = tpu.matmul %1, %16, %cst_11 {dimension_numbers = #tpu.dot_dimension_numbers<[1], [0], [0], [1], [0, 0, 1, 1], [], []>} : vector<128x32xbf16>, vector<32x128xbf16>, vector<128x128xf32> -> vector<128x128xf32>
    %c124_i32 = arith.constant 124 : i32
    %18 = tpu.dynamic_rotate %17 by %c124_i32 dim 0 : vector<128x128xf32>, i32 -> vector<128x128xf32>
    %19 = arith.addf %15, %18 : vector<128x128xf32>
    %20 = vector.shape_cast %19 : vector<128x128xf32> to vector<8x16x128xf32>
    %c0_12 = arith.constant 0 : index
    %c0_13 = arith.constant 0 : index
    %21 = vector.load %arg3[%c0_12, %c0_13] : memref<1x128xf32, #tpu.memory_space<vmem>>, vector<1x128xf32>
    %22 = vector.shape_cast %21 : vector<1x128xf32> to vector<1x1x128xf32>
    %23 = vector.broadcast %22 : vector<1x1x128xf32> to vector<8x16x128xf32>
    %24 = arith.addf %20, %23 : vector<8x16x128xf32>
    %cst_14 = arith.constant 0.000000e+00 : f32
    %25 = vector.broadcast %cst_14 : f32 to vector<8x16x128xf32>
    %26 = arith.maximumf %24, %25 : vector<8x16x128xf32>
    %c0_15 = arith.constant 0 : index
    %c0_16 = arith.constant 0 : index
    %c0_17 = arith.constant 0 : index
    %27 = vector.load %arg4[%c0_15, %c0_16, %c0_17] : memref<1x16x128xf32, #tpu.memory_space<vmem>>, vector<1x16x128xf32>
    %28 = vector.broadcast %27 : vector<1x16x128xf32> to vector<8x16x128xf32>
    %29 = arith.mulf %26, %28 : vector<8x16x128xf32>
    %cst_18 = arith.constant dense<0xFF800000> : vector<8x128xf32>
    %30 = vector.multi_reduction <maximumf>, %29, %cst_18 [1] : vector<8x16x128xf32> to vector<8x128xf32>
    %c0_19 = arith.constant 0 : index
    %c0_20 = arith.constant 0 : index
    %31 = vector.load %arg5[%c0_19, %c0_20] : memref<128x128xf32, #tpu.memory_space<vmem>>, vector<128x128xf32>
    %cst_21 = arith.constant dense<0.000000e+00> : vector<8x128xf32>
    %32 = tpu.matmul %30, %31, %cst_21 {dimension_numbers = #tpu.dot_dimension_numbers<[1], [0], [0], [1], [0, 0, 1, 1], [], []>} : vector<8x128xf32>, vector<128x128xf32>, vector<8x128xf32> -> vector<8x128xf32>
    %c0_22 = arith.constant 0 : index
    %c0_23 = arith.constant 0 : index
    %33 = vector.load %arg6[%c0_22, %c0_23] : memref<1x128xf32, #tpu.memory_space<vmem>>, vector<1x128xf32>
    %34 = vector.broadcast %33 : vector<1x128xf32> to vector<8x128xf32>
    %35 = arith.addf %32, %34 : vector<8x128xf32>
    %c0_24 = arith.constant 0 : index
    %c0_25 = arith.constant 0 : index
    %36 = vector.load %arg7[%c0_24, %c0_25] : memref<8x128xf32, #tpu.memory_space<vmem>>, vector<8x128xf32>
    tpu.vector_store %arg7[%c0_24, %c0_25], %35 {strides = array<i32>} : memref<8x128xf32, #tpu.memory_space<vmem>>, vector<8x128xf32>,
    return
  }
  func.func @transform_0(%arg0: i32) -> (i32, i32, i32) {
    %c0_i32 = arith.constant 0 : i32
    %c0_i32_0 = arith.constant 0 : i32
    %c0_i32_1 = arith.constant 0 : i32
    return %arg0, %c0_i32, %c0_i32_0 : i32, i32, i32
  }
  func.func @transform_1(%arg0: i32) -> (i32, i32) {
    %c0_i32 = arith.constant 0 : i32
    %c0_i32_0 = arith.constant 0 : i32
    %c0_i32_1 = arith.constant 0 : i32
    return %c0_i32, %c0_i32_0 : i32, i32
  }
  func.func @transform_2(%arg0: i32) -> (i32, i32) {
    %c0_i32 = arith.constant 0 : i32
    %c0_i32_0 = arith.constant 0 : i32
    %c0_i32_1 = arith.constant 0 : i32
    return %c0_i32, %c0_i32_0 : i32, i32
  }
  func.func @transform_3(%arg0: i32) -> (i32, i32, i32) {
    %c0_i32 = arith.constant 0 : i32
    %c0_i32_0 = arith.constant 0 : i32
    %c0_i32_1 = arith.constant 0 : i32
    %c0_i32_2 = arith.constant 0 : i32
    return %c0_i32, %c0_i32_0, %c0_i32_1 : i32, i32, i32
  }
  func.func @transform_4(%arg0: i32) -> (i32, i32) {
    %c0_i32 = arith.constant 0 : i32
    %c0_i32_0 = arith.constant 0 : i32
    %c0_i32_1 = arith.constant 0 : i32
    return %c0_i32, %c0_i32_0 : i32, i32
  }
  func.func @transform_5(%arg0: i32) -> (i32, i32) {
    %c0_i32 = arith.constant 0 : i32
    %c0_i32_0 = arith.constant 0 : i32
    %c0_i32_1 = arith.constant 0 : i32
    return %c0_i32, %c0_i32_0 : i32, i32
  }
  func.func @transform_6(%arg0: i32) -> (i32, i32) {
    %c0_i32 = arith.constant 0 : i32
    %c0_i32_0 = arith.constant 0 : i32
    return %arg0, %c0_i32 : i32, i32
  }
}

</mosaic_0001>

<llo_original>
// kernel: cnn_text_forward.1
$region0: #{cnn_text_forward.1}
  #allocation0 [shape = 'u32[]', space=smem, size = 0x4, offset = 0x4, fixed_abs, tag = 'smem constant byte address 0x4 - core index']
  #allocation1 [shape = 'u32[144,128]{1,0:T(1,128)}', space=vmem, size = 0x12000, scoped, tag = 'internal scratch']
  %s0 = inlined_call_operand.vmem [shape: bf16[32,16,32], index: 0, kind: input, shape index: {}]
  %s1 = inlined_call_operand.vmem [shape: bf16[160,128], index: 1, kind: input, shape index: {}]
  %s2 = inlined_call_operand.vmem [shape: f32[1,128], index: 2, kind: input, shape index: {}]
  %s3 = inlined_call_operand.vmem [shape: f32[1,16,128], index: 3, kind: input, shape index: {}]
  %s4 = inlined_call_operand.vmem [shape: f32[128,128], index: 4, kind: input, shape index: {}]
  %s5 = inlined_call_operand.vmem [shape: f32[1,128], index: 5, kind: input, shape index: {}]
  %s6 = inlined_call_operand.vmem [shape: f32[32,128], index: 6, kind: output, shape index: {}]
  %s7 = sld [smem:[#allocation0]]
  $region57: #{cnn_text_forward.1} parent=0
    _
  %s9 = ssub.s32 1, %s7
  %s10 = scalar_select 0, %s9, %s7
  loop: start=0, step=1, limit=6
  $region2: #{cnn_text_forward.1} parent=0 // loop_pre_header
    _
  $region3: #{cnn_text_forward.1} parent=0 // loop_header
    %s12 = sphi 0, %s16
    %p13 = scmp.ge.s32.totalorder %s12, 6
    %s22 = sphi 0, %s24
    %s25 = sphi 0, %s22
    %s26 = sphi 0, %s25
    %s42 = sphi 0, %s26
    %s46 = sphi 0, %s46
    %s48 = sphi 0, %s46
    %s49 = sphi 0, %s48
    %s63 = sphi 0, %s49
    %s67 = sphi 0, %s67
    %s69 = sphi 0, %s67
    %s70 = sphi 0, %s69
    %s84 = sphi 0, %s70
    %s88 = sphi 0, %s88
    %s90 = sphi 0, %s88
    %s91 = sphi 0, %s90
    %s105 = sphi 0, %s91
    %s109 = sphi 0, %s109
    %s111 = sphi 0, %s109
    %s112 = sphi 0, %s111
    %s126 = sphi 0, %s112
    %s130 = sphi 0, %s130
    %s132 = sphi 0, %s130
    %s133 = sphi 0, %s132
    %s147 = sphi 0, %s133
    %s153 = sphi 0, %s155
    %s156 = sphi 0, %s153
    %s157 = sphi 0, %s156
    %s173 = sphi 0, %s157
  $region4: #{cnn_text_forward.1} parent=0 // loop_header_branch
    %15 = sbr.rel (%p13) target = $region8
  $region5: #{cnn_text_forward.1} parent=0 // loop_body
    %s17 = ssub.s32 %s12, 1
    %s18 = ssub.s32 %s12, 2
    %s19 = sadd.s32 %s12, 1
    %s20 = ssub.s32 %s12, %s19
    %p21 = scmp.eq.s32.totalorder %s20, 0
    %s23 = sadd.s32 %s22, 1
    %s24 = scalar_select %p21, %s22, %s23
    %p27 = pneg %p21
    %p28 = scmp.eq.s32.totalorder %s12, 3
    %p29 = por %p27, %p28
    %p30 = scmp.ne.s32.totalorder %s22, %s25
    %p31 = scmp.eq.s32.totalorder %s12, 0
    %p32 = por %p30, %p31
    %p33 = scmp.ne.s32.totalorder %s22, %s25
    %p34 = scmp.eq.s32.totalorder %s17, 3
    %p35 = por %p33, %p34
    %p36 = scmp.ne.s32.totalorder %s25, %s26
    %p37 = scmp.eq.s32.totalorder %s17, 0
    %p38 = por %p36, %p37
    %p39 = scmp.ne.s32.totalorder %s25, %s26
    %p40 = scmp.eq.s32.totalorder %s18, 3
    %p41 = por %p39, %p40
    %p43 = scmp.ne.s32.totalorder %s26, %s42
    %p44 = scmp.eq.s32.totalorder %s18, 0
    %p45 = por %p43, %p44
    %s47 = sadd.s32 %s46, 1
    %p50 = scmp.eq.s32.totalorder %s12, 3
    %p51 = scmp.ne.s32.totalorder %s46, %s48
    %p52 = scmp.eq.s32.totalorder %s12, 0
    %p53 = por %p51, %p52
    %p54 = scmp.ne.s32.totalorder %s46, %s48
    %p55 = scmp.eq.s32.totalorder %s17, 3
    %p56 = por %p54, %p55
    %p57 = scmp.ne.s32.totalorder %s48, %s49
    %p58 = scmp.eq.s32.totalorder %s17, 0
    %p59 = por %p57, %p58
    %p60 = scmp.ne.s32.totalorder %s48, %s49
    %p61 = scmp.eq.s32.totalorder %s18, 3
    %p62 = por %p60, %p61
    %p64 = scmp.ne.s32.totalorder %s49, %s63
    %p65 = scmp.eq.s32.totalorder %s18, 0
    %p66 = por %p64, %p65
    %s68 = sadd.s32 %s67, 1
    %p71 = scmp.eq.s32.totalorder %s12, 3
    %p72 = scmp.ne.s32.totalorder %s67, %s69
    %p73 = scmp.eq.s32.totalorder %s12, 0
    %p74 = por %p72, %p73
    %p75 = scmp.ne.s32.totalorder %s67, %s69
    %p76 = scmp.eq.s32.totalorder %s17, 3
    %p77 = por %p75, %p76
    %p78 = scmp.ne.s32.totalorder %s69, %s70
    %p79 = scmp.eq.s32.totalorder %s17, 0
    %p80 = por %p78, %p79
    %p81 = scmp.ne.s32.totalorder %s69, %s70
    %p82 = scmp.eq.s32.totalorder %s18, 3
    %p83 = por %p81, %p82
    %p85 = scmp.ne.s32.totalorder %s70, %s84
    %p86 = scmp.eq.s32.totalorder %s18, 0
    %p87 = por %p85, %p86
    %s89 = sadd.s32 %s88, 1
    %p92 = scmp.eq.s32.totalorder %s12, 3
    %p93 = scmp.ne.s32.totalorder %s88, %s90
    %p94 = scmp.eq.s32.totalorder %s12, 0
    %p95 = por %p93, %p94
    %p96 = scmp.ne.s32.totalorder %s88, %s90
    %p97 = scmp.eq.s32.totalorder %s17, 3
    %p98 = por %p96, %p97
    %p99 = scmp.ne.s32.totalorder %s90, %s91
    %p100 = scmp.eq.s32.totalorder %s17, 0
    %p101 = por %p99, %p100
    %p102 = scmp.ne.s32.totalorder %s90, %s91
    %p103 = scmp.eq.s32.totalorder %s18, 3
    %p104 = por %p102, %p103
    %p106 = scmp.ne.s32.totalorder %s91, %s105
    %p107 = scmp.eq.s32.totalorder %s18, 0
    %p108 = por %p106, %p107
    %s110 = sadd.s32 %s109, 1
    %p113 = scmp.eq.s32.totalorder %s12, 3
    %p114 = scmp.ne.s32.totalorder %s109, %s111
    %p115 = scmp.eq.s32.totalorder %s12, 0
    %p116 = por %p114, %p115
    %p117 = scmp.ne.s32.totalorder %s109, %s111
    %p118 = scmp.eq.s32.totalorder %s17, 3
    %p119 = por %p117, %p118
    %p120 = scmp.ne.s32.totalorder %s111, %s112
    %p121 = scmp.eq.s32.totalorder %s17, 0
    %p122 = por %p120, %p121
    %p123 = scmp.ne.s32.totalorder %s111, %s112
    %p124 = scmp.eq.s32.totalorder %s18, 3
    %p125 = por %p123, %p124
    %p127 = scmp.ne.s32.totalorder %s112, %s126
    %p128 = scmp.eq.s32.totalorder %s18, 0
    %p129 = por %p127, %p128
    %s131 = sadd.s32 %s130, 1
    %p134 = scmp.eq.s32.totalorder %s12, 3
    %p135 = scmp.ne.s32.totalorder %s130, %s132
    %p136 = scmp.eq.s32.totalorder %s12, 0
    %p137 = por %p135, %p136
    %p138 = scmp.ne.s32.totalorder %s130, %s132
    %p139 = scmp.eq.s32.totalorder %s17, 3
    %p140 = por %p138, %p139
    %p141 = scmp.ne.s32.totalorder %s132, %s133
    %p142 = scmp.eq.s32.totalorder %s17, 0
    %p143 = por %p141, %p142
    %p144 = scmp.ne.s32.totalorder %s132, %s133
    %p145 = scmp.eq.s32.totalorder %s18, 3
    %p146 = por %p144, %p145
    %p148 = scmp.ne.s32.totalorder %s133, %s147
    %p149 = scmp.eq.s32.totalorder %s18, 0
    %p150 = por %p148, %p149
    %s151 = ssub.s32 %s12, %s19
    %p152 = scmp.eq.s32.totalorder %s151, 0
    %s154 = sadd.s32 %s153, 1
    %s155 = scalar_select %p152, %s153, %s154
    %p158 = pneg %p152
    %p159 = scmp.eq.s32.totalorder %s12, 3
    %p160 = por %p158, %p159
    %p161 = scmp.ne.s32.totalorder %s153, %s156
    %p162 = scmp.eq.s32.totalorder %s12, 0
    %p163 = por %p161, %p162
    %p164 = scmp.ne.s32.totalorder %s153, %s156
    %p165 = scmp.eq.s32.totalorder %s17, 3
    %p166 = por %p164, %p165
    %p167 = scmp.ne.s32.totalorder %s156, %s157
    %p168 = scmp.eq.s32.totalorder %s17, 0
    %p169 = por %p167, %p168
    %p170 = scmp.ne.s32.totalorder %s156, %s157
    %p171 = scmp.eq.s32.totalorder %s18, 3
    %p172 = por %p170, %p171
    %p174 = scmp.ne.s32.totalorder %s157, %s173
    %p175 = scmp.eq.s32.totalorder %s18, 0
    %p176 = por %p174, %p175
    %p177 = scmp.le.s32.totalorder 1, %s12
    %p178 = scmp.lt.s32.totalorder %s12, 5
    %p179 = pnand %p177, %p178
    %p180 = pneg %p179
    // Predicated region
    $region9: #{cnn_text_forward.1} parent=5 // pred_check
      _
    $region10: #{cnn_text_forward.1} parent=5 // pred_check_branch
      %182 = sbr.rel (%p179) target = $region12
    $region11: #{cnn_text_forward.1} parent=5 // pred_region
      %s183 = ssub.s32 %s12, 1
      // Predicated region
      $region13: #{cnn_text_forward.1} parent=11 // pred_check
        %p184 = pneg %p59
      $region14: #{cnn_text_forward.1} parent=11 // pred_check_branch
        %186 = sbr.rel (%p184) target = $region16
      $region15: #{cnn_text_forward.1} parent=11 // pred_region
        _
      $region16: #{cnn_text_forward.1} parent=11 // pred_fallthru
        _
      // Predicated region
      $region17: #{cnn_text_forward.1} parent=11 // pred_check
        %p187 = pneg %p80
      $region18: #{cnn_text_forward.1} parent=11 // pred_check_branch
        %189 = sbr.rel (%p187) target = $region20
      $region19: #{cnn_text_forward.1} parent=11 // pred_region
        _
      $region20: #{cnn_text_forward.1} parent=11 // pred_fallthru
        _
      // Predicated region
      $region21: #{cnn_text_forward.1} parent=11 // pred_check
        %p190 = pneg %p101
      $region22: #{cnn_text_forward.1} parent=11 // pred_check_branch
        %192 = sbr.rel (%p190) target = $region24
      $region23: #{cnn_text_forward.1} parent=11 // pred_region
        _
      $region24: #{cnn_text_forward.1} parent=11 // pred_fallthru
        _
      // Predicated region
      $region25: #{cnn_text_forward.1} parent=11 // pred_check
        %p193 = pneg %p122
      $region26: #{cnn_text_forward.1} parent=11 // pred_check_branch
        %195 = sbr.rel (%p193) target = $region28
      $region27: #{cnn_text_forward.1} parent=11 // pred_region
        _
      $region28: #{cnn_text_forward.1} parent=11 // pred_fallthru
        _
      // Predicated region
      $region29: #{cnn_text_forward.1} parent=11 // pred_check
        %p196 = pneg %p143
      $region30: #{cnn_text_forward.1} parent=11 // pred_check_branch
        %198 = sbr.rel (%p196) target = $region32
      $region31: #{cnn_text_forward.1} parent=11 // pred_region
        _
      $region32: #{cnn_text_forward.1} parent=11 // pred_fallthru
        _
    $region12: #{cnn_text_forward.1} parent=5 // pred_fallthru
      _
    %p199 = scmp.lt.s32.totalorder %s12, 4
    // Predicated region
    $region33: #{cnn_text_forward.1} parent=5 // pred_check
      %p200 = pneg %p199
    $region34: #{cnn_text_forward.1} parent=5 // pred_check_branch
      %202 = sbr.rel (%p200) target = $region36
    $region35: #{cnn_text_forward.1} parent=5 // pred_region
      // Predicated region
      $region37: #{cnn_text_forward.1} parent=35 // pred_check
        %p203 = pneg %p32
      $region38: #{cnn_text_forward.1} parent=35 // pred_check_branch
        %205 = sbr.rel (%p203) target = $region40
      $region39: #{cnn_text_forward.1} parent=35 // pred_region
        %s206 = smul.u32 8, %s12
        %p207 = scmp.lt.s32.totalorder %s206, 31
        %s208 = scalar_select %p207, %s206, 31
        %s209 = smul.addr %s208, 2
        %s210 = smul.addr %s209, 4
        %s211 = scalar_lea.vmem %s0, %s210
        %s212 = smul.u32 8, %s12
      $region40: #{cnn_text_forward.1} parent=35 // pred_fallthru
        _
    $region36: #{cnn_text_forward.1} parent=5 // pred_fallthru
      _
    %p213 = scmp.le.s32.totalorder 1, %s12
    %p214 = scmp.lt.s32.totalorder %s12, 5
    %p215 = pnand %p213, %p214
    %p216 = pneg %p215
    // Predicated region
    $region41: #{cnn_text_forward.1} parent=5 // pred_check
      _
    $region42: #{cnn_text_forward.1} parent=5 // pred_check_branch
      %218 = sbr.rel (%p215) target = $region44
    $region43: #{cnn_text_forward.1} parent=5 // pred_region
      %s219 = ssub.s32 %s12, 1
      %s220 = smul.u32 8, %s17
      %p221 = scmp.lt.s32.totalorder %s220, 31
      %s222 = scalar_select %p221, %s220, 31
      %s223 = smul.addr %s222, 2
      %s224 = smul.addr %s223, 4
      %s225 = scalar_lea.vmem %s0, %s224
      %p226 = pneg %p38
      %p227 = pneg %p35
      %p228 = pneg %p59
      %p229 = pneg %p56
      %p230 = pneg %p80
      %p231 = pneg %p77
      %p232 = pneg %p101
      %p233 = pneg %p98
      %p234 = pneg %p122
      %p235 = pneg %p119
      %p236 = pneg %p143
      %p237 = pneg %p140
      %p238 = pneg %p169
      %p239 = pneg %p166
      %p240 = scmp.lt.s32.totalorder %s17, 3
      %s241 = scalar_select %p240, %s17, 3
      %s242 = smul.addr %s241, 8
      %s243 = scalar_lea.vmem %s6, %s242
      %s244 = smul.u32 8, %s17
      %p245 = scmp.lt.s32.totalorder %s244, 31
      %s246 = scalar_select %p245, %s244, 31
      %s247 = smul.addr %s246, 2
      %s248 = smul.addr %s247, 4
      %s249 = scalar_lea.vmem %s0, %s248
      %s250 = smul.u32 8, %s17
      %p251 = scmp.lt.s32.totalorder %s17, 3
      %s252 = scalar_select %p251, %s17, 3
      %s253 = smul.addr %s252, 8
      %s254 = scalar_lea.vmem %s6, %s253
      %v256 = vld [vmem:[%s249] sm:$0xf]
      %v257 = vld [vmem:[%s249 + $0x4] sm:$0xf]
      %v258 = vld [vmem:[%s249 + $0x8] sm:$0xf]
      %v259 = vld [vmem:[%s249 + $0xc] sm:$0xf]
      %v260 = vld [vmem:[%s249 + $0x10] sm:$0xf]
      %v261 = vld [vmem:[%s249 + $0x14] sm:$0xf]
      %v262 = vld [vmem:[%s249 + $0x18] sm:$0xf]
      %v263 = vld [vmem:[%s249 + $0x1c] sm:$0xf]
      %v264 = vld [vmem:[%s249 + $0x20] sm:$0xf]
      %v265 = vld [vmem:[%s249 + $0x24] sm:$0xf]
      %v266 = vld [vmem:[%s249 + $0x28] sm:$0xf]
      %v267 = vld [vmem:[%s249 + $0x2c] sm:$0xf]
      %v268 = vld [vmem:[%s249 + $0x30] sm:$0xf]
      %v269 = vld [vmem:[%s249 + $0x34] sm:$0xf]
      %v270 = vld [vmem:[%s249 + $0x38] sm:$0xf]
      %v271 = vld [vmem:[%s249 + $0x3c] sm:$0xf]
      %v272 = vld [vmem:[%s1] sm:$0xf]
      %v273 = vld [vmem:[%s1 + $0x4] sm:$0xf]
      %v274 = vld [vmem:[%s1 + $0x8] sm:$0xf]
      %v275 = vld [vmem:[%s1 + $0xc] sm:$0xf]
      %v276 = vld [vmem:[%s1 + $0x10] sm:$0xf]
      %v277 = vld [vmem:[%s1 + $0x14] sm:$0xf]
      %v278 = vld [vmem:[%s1 + $0x18] sm:$0xf]
      %v279 = vld [vmem:[%s1 + $0x1c] sm:$0xf]
      %v296 = vunpack.c.l.b16 %v256
      %v297 = vunpack.c.l.b16 %v257
      %v298 = vunpack.c.l.b16 %v258
      %v299 = vunpack.c.l.b16 %v259
      %v300 = vunpack.c.l.b16 %v260
      %v301 = vunpack.c.l.b16 %v261
      %v302 = vunpack.c.l.b16 %v262
      %v303 = vunpack.c.l.b16 %v263
      %v304 = vunpack.c.l.b16 %v264
      %v305 = vunpack.c.l.b16 %v265
      %v306 = vunpack.c.l.b16 %v266
      %v307 = vunpack.c.l.b16 %v267
      %v308 = vunpack.c.l.b16 %v268
      %v309 = vunpack.c.l.b16 %v269
      %v310 = vunpack.c.l.b16 %v270
      %v311 = vunpack.c.l.b16 %v271
      %v312 = vpack.c.b16 %v297, %v296
      %v313 = vpack.c.b16 %v299, %v298
      %v314 = vpack.c.b16 %v301, %v300
      %v315 = vpack.c.b16 %v303, %v302
      %v316 = vpack.c.b16 %v305, %v304
      %v317 = vpack.c.b16 %v307, %v306
      %v318 = vpack.c.b16 %v309, %v308
      %v319 = vpack.c.b16 %v311, %v310
      %v324 = vunpack.c.l.b16 %v276
      %v325 = vunpack.c.l.b16 %v277
      %v326 = vunpack.c.l.b16 %v278
      %v327 = vunpack.c.l.b16 %v279
      %v328 = vpack.c.b16 %v325, %v324
      %v329 = vpack.c.b16 %v327, %v326
      %vm332 = vcmask 261120
      %v334 = vsel %vm332, %v312, 0
      %v337 = vsel %vm332, %v313, 0
      %v340 = vsel %vm332, %v314, 0
      %v343 = vsel %vm332, %v315, 0
      %v346 = vsel %vm332, %v316, 0
      %v349 = vsel %vm332, %v317, 0
      %v352 = vsel %vm332, %v318, 0
      %v355 = vsel %vm332, %v319, 0
      %357 = vmatprep.subr.bf16.mxu0 0
      %358 = vmatpush1.bf16.msra.mxu0 %v328
      %359 = vmatprep.subr.bf16.mxu0 0
      %360 = vmatpush1.bf16.msra.mxu0 %v329
      %361 = vmatprep.subr.bf16.mxu0 0
      %362 = vmatpush1.bf16.msra.mxu0 0
      %363 = vmatprep.subr.bf16.mxu0 0
      %364 = vmatpush1.bf16.msra.mxu0 0
      %365 = vmatprep.subr.bf16.mxu0 0
      %366 = vmatpush1.bf16.msra.mxu0 0
      %367 = vmatprep.subr.bf16.mxu0 0
      %368 = vmatpush1.bf16.msra.mxu0 0
      %369 = vmatprep.subr.bf16.mxu0 0
      %370 = vmatpush1.bf16.msra.mxu0 0
      %371 = vmatprep.subr.bf16.mxu0 0
      %372 = vmatpush1.bf16.msra.mxu0 0
      %373 = vmatprep.subr.bf16.mxu0 0
      %374 = vmatpush1.bf16.msra.mxu0 0
      %375 = vmatprep.subr.bf16.mxu0 0
      %376 = vmatpush1.bf16.msra.mxu0 0
      %377 = vmatprep.subr.bf16.mxu0 0
      %378 = vmatpush1.bf16.msra.mxu0 0
      %379 = vmatprep.subr.bf16.mxu0 0
      %380 = vmatpush1.bf16.msra.mxu0 0
      %381 = vmatprep.subr.bf16.mxu0 0
      %382 = vmatpush1.bf16.msra.mxu0 0
      %383 = vmatprep.subr.bf16.mxu0 0
      %384 = vmatpush1.bf16.msra.mxu0 0
      %385 = vmatprep.subr.bf16.mxu0 0
      %386 = vmatpush1.bf16.msra.mxu0 0
      %387 = vmatprep.subr.bf16.mxu0 0
      %388 = vmatpush1.bf16.msra.mxu0 0
      %389 = vmatprep.mubr.bf16.mxu0 0
      %390 = vmatmul.mubr.bf16.gmra.mrb[0].mxu0 %v334
      %v391 = vpop.f32.mrb[0].mxu0
      %v392 = vadd.f32 0.0, %v391
      %v393 = vpop.f32.mrb[0].mxu0
      %v394 = vpop.f32.mrb[0].mxu0
      %v395 = vadd.f32 0.0, %v394
      %v396 = vpop.f32.mrb[0].mxu0
      %397 = vmatprep.mubr.bf16.mxu0 0
      %398 = vmatmul.mubr.bf16.gmra.mrb[0].mxu0 %v337
      %v399 = vpop.f32.mrb[0].mxu0
      %v400 = vadd.f32 0.0, %v399
      %v401 = vpop.f32.mrb[0].mxu0
      %v402 = vpop.f32.mrb[0].mxu0
      %v403 = vadd.f32 0.0, %v402
      %v404 = vpop.f32.mrb[0].mxu0
      %405 = vmatprep.mubr.bf16.mxu0 0
      %406 = vmatmul.mubr.bf16.gmra.mrb[0].mxu0 %v340
      %v407 = vpop.f32.mrb[0].mxu0
      %v408 = vadd.f32 0.0, %v407
      %v409 = vpop.f32.mrb[0].mxu0
      %v410 = vpop.f32.mrb[0].mxu0
      %v411 = vadd.f32 0.0, %v410
      %v412 = vpop.f32.mrb[0].mxu0
      %413 = vmatprep.mubr.bf16.mxu0 0
      %414 = vmatmul.mubr.bf16.gmra.mrb[0].mxu0 %v343
      %v415 = vpop.f32.mrb[0].mxu0
      %v416 = vadd.f32 0.0, %v415
      %v417 = vpop.f32.mrb[0].mxu0
      %v418 = vpop.f32.mrb[0].mxu0
      %v419 = vadd.f32 0.0, %v418
      %v420 = vpop.f32.mrb[0].mxu0
      %421 = vmatprep.mubr.bf16.mxu0 0
      %422 = vmatmul.mubr.bf16.gmra.mrb[0].mxu0 %v346
      %v423 = vpop.f32.mrb[0].mxu0
      %v424 = vadd.f32 0.0, %v423
      %v425 = vpop.f32.mrb[0].mxu0
      %v426 = vpop.f32.mrb[0].mxu0
      %v427 = vadd.f32 0.0, %v426
      %v428 = vpop.f32.mrb[0].mxu0
      %429 = vmatprep.mubr.bf16.mxu0 0
      %430 = vmatmul.mubr.bf16.gmra.mrb[0].mxu0 %v349
      %v431 = vpop.f32.mrb[0].mxu0
      %v432 = vadd.f32 0.0, %v431
      %v433 = vpop.f32.mrb[0].mxu0
      %v434 = vpop.f32.mrb[0].mxu0
      %v435 = vadd.f32 0.0, %v434
      %v436 = vpop.f32.mrb[0].mxu0
      %437 = vmatprep.mubr.bf16.mxu0 0
      %438 = vmatmul.mubr.bf16.gmra.mrb[0].mxu0 %v352
      %v439 = vpop.f32.mrb[0].mxu0
      %v440 = vadd.f32 0.0, %v439
      %v441 = vpop.f32.mrb[0].mxu0
      %v442 = vpop.f32.mrb[0].mxu0
      %v443 = vadd.f32 0.0, %v442
      %v444 = vpop.f32.mrb[0].mxu0
      %445 = vmatprep.mubr.bf16.mxu0 0
      %446 = vmatmul.mubr.bf16.gmra.mrb[0].mxu0 %v355
      %v447 = vpop.f32.mrb[0].mxu0
      %v448 = vadd.f32 0.0, %v447
      %v449 = vpop.f32.mrb[0].mxu0
      %v450 = vpop.f32.mrb[0].mxu0
      %v451 = vadd.f32 0.0, %v450
      %v452 = vpop.f32.mrb[0].mxu0
      %453 = vdwg.mxu0
      %v454 = vrot.slane %v392, 1
      %v455 = vrot.slane %v395, 1
      %v456 = vrot.slane %v400, 1
      %v457 = vrot.slane %v403, 1
      %v458 = vrot.slane %v408, 1
      %v459 = vrot.slane %v411, 1
      %v460 = vrot.slane %v416, 1
      %v461 = vrot.slane %v419, 1
      %v462 = vrot.slane %v424, 1
      %v463 = vrot.slane %v427, 1
      %v464 = vrot.slane %v432, 1
      %v465 = vrot.slane %v435, 1
      %v466 = vrot.slane %v440, 1
      %v467 = vrot.slane %v443, 1
      %v468 = vrot.slane %v448, 1
      %v469 = vrot.slane %v451, 1
      %v470 = vlaneseq
      %v471 = vshrl.u32 %v470, 7
      %vm472 = vcmp.lt.s32.totalorder %v471, 7
      %v473 = vsel %vm472, %v468, %v469
      %v474 = vsel %vm472, %v467, %v468
      %v475 = vsel %vm472, %v466, %v467
      %v476 = vsel %vm472, %v465, %v466
      %v477 = vsel %vm472, %v464, %v465
      %v478 = vsel %vm472, %v463, %v464
      %v479 = vsel %vm472, %v462, %v463
      %v480 = vsel %vm472, %v461, %v462
      %v481 = vsel %vm472, %v460, %v461
      %v482 = vsel %vm472, %v459, %v460
      %v483 = vsel %vm472, %v458, %v459
      %v484 = vsel %vm472, %v457, %v458
      %v485 = vsel %vm472, %v456, %v457
      %v486 = vsel %vm472, %v455, %v456
      %v487 = vsel %vm472, %v454, %v455
      %v488 = vsel %vm472, %v469, %v454
      %v493 = vunpack.c.l.b16 %v272
      %v494 = vunpack.c.l.b16 %v273
      %v495 = vunpack.c.l.b16 %v274
      %v496 = vunpack.c.l.b16 %v275
      %v497 = vpack.c.b16 %v494, %v493
      %v498 = vpack.c.b16 %v496, %v495
      %501 = vmatprep.subr.bf16.mxu0 0
      %502 = vmatpush1.bf16.msra.mxu0 %v497
      %503 = vmatprep.subr.bf16.mxu0 0
      %504 = vmatpush1.bf16.msra.mxu0 %v498
      %505 = vmatprep.subr.bf16.mxu0 0
      %506 = vmatpush1.bf16.msra.mxu0 0
      %507 = vmatprep.subr.bf16.mxu0 0
      %508 = vmatpush1.bf16.msra.mxu0 0
      %509 = vmatprep.subr.bf16.mxu0 0
      %510 = vmatpush1.bf16.msra.mxu0 0
      %511 = vmatprep.subr.bf16.mxu0 0
      %512 = vmatpush1.bf16.msra.mxu0 0
      %513 = vmatprep.subr.bf16.mxu0 0
      %514 = vmatpush1.bf16.msra.mxu0 0
      %515 = vmatprep.subr.bf16.mxu0 0
      %516 = vmatpush1.bf16.msra.mxu0 0
      %517 = vmatprep.subr.bf16.mxu0 0
      %518 = vmatpush1.bf16.msra.mxu0 0
      %519 = vmatprep.subr.bf16.mxu0 0
      %520 = vmatpush1.bf16.msra.mxu0 0
      %521 = vmatprep.subr.bf16.mxu0 0
      %522 = vmatpush1.bf16.msra.mxu0 0
      %523 = vmatprep.subr.bf16.mxu0 0
      %524 = vmatpush1.bf16.msra.mxu0 0
      %525 = vmatprep.subr.bf16.mxu0 0
      %526 = vmatpush1.bf16.msra.mxu0 0
      %527 = vmatprep.subr.bf16.mxu0 0
      %528 = vmatpush1.bf16.msra.mxu0 0
      %529 = vmatprep.subr.bf16.mxu0 0
      %530 = vmatpush1.bf16.msra.mxu0 0
      %531 = vmatprep.subr.bf16.mxu0 0
      %532 = vmatpush1.bf16.msra.mxu0 0
      %533 = vmatprep.mubr.bf16.mxu0 0
      %534 = vmatmul.mubr.bf16.gmra.mrb[0].mxu0 %v334
      %v535 = vpop.f32.mrb[0].mxu0
      %v536 = vadd.f32 %v487, %v535
      %v537 = vpop.f32.mrb[0].mxu0
      %v538 = vpop.f32.mrb[0].mxu0
      %v539 = vadd.f32 %v486, %v538
      %v540 = vpop.f32.mrb[0].mxu0
      %541 = vmatprep.mubr.bf16.mxu0 0
      %542 = vmatmul.mubr.bf16.gmra.mrb[0].mxu0 %v337
      %v543 = vpop.f32.mrb[0].mxu0
      %v544 = vadd.f32 %v485, %v543
      %v545 = vpop.f32.mrb[0].mxu0
      %v546 = vpop.f32.mrb[0].mxu0
      %v547 = vadd.f32 %v484, %v546
      %v548 = vpop.f32.mrb[0].mxu0
      %549 = vmatprep.mubr.bf16.mxu0 0
      %550 = vmatmul.mubr.bf16.gmra.mrb[0].mxu0 %v340
      %v551 = vpop.f32.mrb[0].mxu0
      %v552 = vadd.f32 %v483, %v551
      %v553 = vpop.f32.mrb[0].mxu0
      %v554 = vpop.f32.mrb[0].mxu0
      %v555 = vadd.f32 %v482, %v554
      %v556 = vpop.f32.mrb[0].mxu0
      %557 = vmatprep.mubr.bf16.mxu0 0
      %558 = vmatmul.mubr.bf16.gmra.mrb[0].mxu0 %v343
      %v559 = vpop.f32.mrb[0].mxu0
      %v560 = vadd.f32 %v481, %v559
      %v561 = vpop.f32.mrb[0].mxu0
      %v562 = vpop.f32.mrb[0].mxu0
      %v563 = vadd.f32 %v480, %v562
      %v564 = vpop.f32.mrb[0].mxu0
      %565 = vmatprep.mubr.bf16.mxu0 0
      %566 = vmatmul.mubr.bf16.gmra.mrb[0].mxu0 %v346
      %v567 = vpop.f32.mrb[0].mxu0
      %v568 = vadd.f32 %v479, %v567
      %v569 = vpop.f32.mrb[0].mxu0
      %v570 = vpop.f32.mrb[0].mxu0
      %v571 = vadd.f32 %v478, %v570
      %v572 = vpop.f32.mrb[0].mxu0
      %573 = vmatprep.mubr.bf16.mxu0 0
      %574 = vmatmul.mubr.bf16.gmra.mrb[0].mxu0 %v349
      %v575 = vpop.f32.mrb[0].mxu0
      %v576 = vadd.f32 %v477, %v575
      %v577 = vpop.f32.mrb[0].mxu0
      %v578 = vpop.f32.mrb[0].mxu0
      %v579 = vadd.f32 %v476, %v578
      %v580 = vpop.f32.mrb[0].mxu0
      %581 = vmatprep.mubr.bf16.mxu0 0
      %582 = vmatmul.mubr.bf16.gmra.mrb[0].mxu0 %v352
      %v583 = vpop.f32.mrb[0].mxu0
      %v584 = vadd.f32 %v475, %v583
      %v585 = vpop.f32.mrb[0].mxu0
      %v586 = vpop.f32.mrb[0].mxu0
      %v587 = vadd.f32 %v474, %v586
      %v588 = vpop.f32.mrb[0].mxu0
      %589 = vmatprep.mubr.bf16.mxu0 0
      %590 = vmatmul.mubr.bf16.gmra.mrb[0].mxu0 %v355
      %v591 = vpop.f32.mrb[0].mxu0
      %v592 = vadd.f32 %v473, %v591
      %v593 = vpop.f32.mrb[0].mxu0
      %v594 = vpop.f32.mrb[0].mxu0
      %v595 = vadd.f32 %v488, %v594
      %v596 = vpop.f32.mrb[0].mxu0
      %597 = vdwg.mxu0
      %v598 = vld [vmem:[%s1 + $0x20] sm:$0xf]
      %v599 = vld [vmem:[%s1 + $0x24] sm:$0xf]
      %v600 = vld [vmem:[%s1 + $0x28] sm:$0xf]
      %v601 = vld [vmem:[%s1 + $0x2c] sm:$0xf]
      %v606 = vunpack.c.l.b16 %v598
      %v607 = vunpack.c.l.b16 %v599
      %v608 = vunpack.c.l.b16 %v600
      %v609 = vunpack.c.l.b16 %v601
      %v610 = vpack.c.b16 %v607, %v606
      %v611 = vpack.c.b16 %v609, %v608
      %614 = vmatprep.subr.bf16.mxu0 0
      %615 = vmatpush1.bf16.msra.mxu0 %v610
      %616 = vmatprep.subr.bf16.mxu0 0
      %617 = vmatpush1.bf16.msra.mxu0 %v611
      %618 = vmatprep.subr.bf16.mxu0 0
      %619 = vmatpush1.bf16.msra.mxu0 0
      %620 = vmatprep.subr.bf16.mxu0 0
      %621 = vmatpush1.bf16.msra.mxu0 0
      %622 = vmatprep.subr.bf16.mxu0 0
      %623 = vmatpush1.bf16.msra.mxu0 0
      %624 = vmatprep.subr.bf16.mxu0 0
      %625 = vmatpush1.bf16.msra.mxu0 0
      %626 = vmatprep.subr.bf16.mxu0 0
      %627 = vmatpush1.bf16.msra.mxu0 0
      %628 = vmatprep.subr.bf16.mxu0 0
      %629 = vmatpush1.bf16.msra.mxu0 0
      %630 = vmatprep.subr.bf16.mxu0 0
      %631 = vmatpush1.bf16.msra.mxu0 0
      %632 = vmatprep.subr.bf16.mxu0 0
      %633 = vmatpush1.bf16.msra.mxu0 0
      %634 = vmatprep.subr.bf16.mxu0 0
      %635 = vmatpush1.bf16.msra.mxu0 0
      %636 = vmatprep.subr.bf16.mxu0 0
      %637 = vmatpush1.bf16.msra.mxu0 0
      %638 = vmatprep.subr.bf16.mxu0 0
      %639 = vmatpush1.bf16.msra.mxu0 0
      %640 = vmatprep.subr.bf16.mxu0 0
      %641 = vmatpush1.bf16.msra.mxu0 0
      %642 = vmatprep.subr.bf16.mxu0 0
      %643 = vmatpush1.bf16.msra.mxu0 0
      %644 = vmatprep.subr.bf16.mxu0 0
      %645 = vmatpush1.bf16.msra.mxu0 0
      %646 = vmatprep.mubr.bf16.mxu0 0
      %647 = vmatmul.mubr.bf16.gmra.mrb[0].mxu0 %v334
      %v648 = vpop.f32.mrb[0].mxu0
      %v649 = vadd.f32 0.0, %v648
      %v650 = vpop.f32.mrb[0].mxu0
      %v651 = vpop.f32.mrb[0].mxu0
      %v652 = vadd.f32 0.0, %v651
      %v653 = vpop.f32.mrb[0].mxu0
      %654 = vmatprep.mubr.bf16.mxu0 0
      %655 = vmatmul.mubr.bf16.gmra.mrb[0].mxu0 %v337
      %v656 = vpop.f32.mrb[0].mxu0
      %v657 = vadd.f32 0.0, %v656
      %v658 = vpop.f32.mrb[0].mxu0
      %v659 = vpop.f32.mrb[0].mxu0
      %v660 = vadd.f32 0.0, %v659
      %v661 = vpop.f32.mrb[0].mxu0
      %662 = vmatprep.mubr.bf16.mxu0 0
      %663 = vmatmul.mubr.bf16.gmra.mrb[0].mxu0 %v340
      %v664 = vpop.f32.mrb[0].mxu0
      %v665 = vadd.f32 0.0, %v664
      %v666 = vpop.f32.mrb[0].mxu0
      %v667 = vpop.f32.mrb[0].mxu0
      %v668 = vadd.f32 0.0, %v667
      %v669 = vpop.f32.mrb[0].mxu0
      %670 = vmatprep.mubr.bf16.mxu0 0
      %671 = vmatmul.mubr.bf16.gmra.mrb[0].mxu0 %v343
      %v672 = vpop.f32.mrb[0].mxu0
      %v673 = vadd.f32 0.0, %v672
      %v674 = vpop.f32.mrb[0].mxu0
      %v675 = vpop.f32.mrb[0].mxu0
      %v676 = vadd.f32 0.0, %v675
      %v677 = vpop.f32.mrb[0].mxu0
      %678 = vmatprep.mubr.bf16.mxu0 0
      %679 = vmatmul.mubr.bf16.gmra.mrb[0].mxu0 %v346
      %v680 = vpop.f32.mrb[0].mxu0
      %v681 = vadd.f32 0.0, %v680
      %v682 = vpop.f32.mrb[0].mxu0
      %v683 = vpop.f32.mrb[0].mxu0
      %v684 = vadd.f32 0.0, %v683
      %v685 = vpop.f32.mrb[0].mxu0
      %686 = vmatprep.mubr.bf16.mxu0 0
      %687 = vmatmul.mubr.bf16.gmra.mrb[0].mxu0 %v349
      %v688 = vpop.f32.mrb[0].mxu0
      %v689 = vadd.f32 0.0, %v688
      %v690 = vpop.f32.mrb[0].mxu0
      %v691 = vpop.f32.mrb[0].mxu0
      %v692 = vadd.f32 0.0, %v691
      %v693 = vpop.f32.mrb[0].mxu0
      %694 = vmatprep.mubr.bf16.mxu0 0
      %695 = vmatmul.mubr.bf16.gmra.mrb[0].mxu0 %v352
      %v696 = vpop.f32.mrb[0].mxu0
      %v697 = vadd.f32 0.0, %v696
      %v698 = vpop.f32.mrb[0].mxu0
      %v699 = vpop.f32.mrb[0].mxu0
      %v700 = vadd.f32 0.0, %v699
      %v701 = vpop.f32.mrb[0].mxu0
      %702 = vmatprep.mubr.bf16.mxu0 0
      %703 = vmatmul.mubr.bf16.gmra.mrb[0].mxu0 %v355
      %v704 = vpop.f32.mrb[0].mxu0
      %v705 = vadd.f32 0.0, %v704
      %v706 = vpop.f32.mrb[0].mxu0
      %v707 = vpop.f32.mrb[0].mxu0
      %v708 = vadd.f32 0.0, %v707
      %v709 = vpop.f32.mrb[0].mxu0
      %710 = vdwg.mxu0
      %v711 = vrot.slane %v649, 2
      %v712 = vrot.slane %v652, 2
      %v713 = vrot.slane %v657, 2
      %v714 = vrot.slane %v660, 2
      %v715 = vrot.slane %v665, 2
      %v716 = vrot.slane %v668, 2
      %v717 = vrot.slane %v673, 2
      %v718 = vrot.slane %v676, 2
      %v719 = vrot.slane %v681, 2
      %v720 = vrot.slane %v684, 2
      %v721 = vrot.slane %v689, 2
      %v722 = vrot.slane %v692, 2
      %v723 = vrot.slane %v697, 2
      %v724 = vrot.slane %v700, 2
      %v725 = vrot.slane %v705, 2
      %v726 = vrot.slane %v708, 2
      %vm727 = vcmp.lt.s32.totalorder %v471, 6
      %v728 = vsel %vm727, %v725, %v726
      %v729 = vsel %vm727, %v724, %v725
      %v730 = vsel %vm727, %v723, %v724
      %v731 = vsel %vm727, %v722, %v723
      %v732 = vsel %vm727, %v721, %v722
      %v733 = vsel %vm727, %v720, %v721
      %v734 = vsel %vm727, %v719, %v720
      %v735 = vsel %vm727, %v718, %v719
      %v736 = vsel %vm727, %v717, %v718
      %v737 = vsel %vm727, %v716, %v717
      %v738 = vsel %vm727, %v715, %v716
      %v739 = vsel %vm727, %v714, %v715
      %v740 = vsel %vm727, %v713, %v714
      %v741 = vsel %vm727, %v712, %v713
      %v742 = vsel %vm727, %v711, %v712
      %v743 = vsel %vm727, %v726, %v711
      %v744 = vadd.f32 %v536, %v742
      %v745 = vadd.f32 %v539, %v741
      %v746 = vadd.f32 %v544, %v740
      %v747 = vadd.f32 %v547, %v739
      %v748 = vadd.f32 %v552, %v738
      %v749 = vadd.f32 %v555, %v737
      %v750 = vadd.f32 %v560, %v736
      %v751 = vadd.f32 %v563, %v735
      %v752 = vadd.f32 %v568, %v734
      %v753 = vadd.f32 %v571, %v733
      %v754 = vadd.f32 %v576, %v732
      %v755 = vadd.f32 %v579, %v731
      %v756 = vadd.f32 %v584, %v730
      %v757 = vadd.f32 %v587, %v729
      %v758 = vadd.f32 %v592, %v728
      %v759 = vadd.f32 %v595, %v743
      %v760 = vld [vmem:[%s1 + $0x30] sm:$0xf]
      %v761 = vld [vmem:[%s1 + $0x34] sm:$0xf]
      %v762 = vld [vmem:[%s1 + $0x38] sm:$0xf]
      %v763 = vld [vmem:[%s1 + $0x3c] sm:$0xf]
      %v768 = vunpack.c.l.b16 %v760
      %v769 = vunpack.c.l.b16 %v761
      %v770 = vunpack.c.l.b16 %v762
      %v771 = vunpack.c.l.b16 %v763
      %v772 = vpack.c.b16 %v769, %v768
      %v773 = vpack.c.b16 %v771, %v770
      %776 = vmatprep.subr.bf16.mxu0 0
      %777 = vmatpush1.bf16.msra.mxu0 %v772
      %778 = vmatprep.subr.bf16.mxu0 0
      %779 = vmatpush1.bf16.msra.mxu0 %v773
      %780 = vmatprep.subr.bf16.mxu0 0
      %781 = vmatpush1.bf16.msra.mxu0 0
      %782 = vmatprep.subr.bf16.mxu0 0
      %783 = vmatpush1.bf16.msra.mxu0 0
      %784 = vmatprep.subr.bf16.mxu0 0
      %785 = vmatpush1.bf16.msra.mxu0 0
      %786 = vmatprep.subr.bf16.mxu0 0
      %787 = vmatpush1.bf16.msra.mxu0 0
      %788 = vmatprep.subr.bf16.mxu0 0
      %789 = vmatpush1.bf16.msra.mxu0 0
      %790 = vmatprep.subr.bf16.mxu0 0
      %791 = vmatpush1.bf16.msra.mxu0 0
      %792 = vmatprep.subr.bf16.mxu0 0
      %793 = vmatpush1.bf16.msra.mxu0 0
      %794 = vmatprep.subr.bf16.mxu0 0
      %795 = vmatpush1.bf16.msra.mxu0 0
      %796 = vmatprep.subr.bf16.mxu0 0
      %797 = vmatpush1.bf16.msra.mxu0 0
      %798 = vmatprep.subr.bf16.mxu0 0
      %799 = vmatpush1.bf16.msra.mxu0 0
      %800 = vmatprep.subr.bf16.mxu0 0
      %801 = vmatpush1.bf16.msra.mxu0 0
      %802 = vmatprep.subr.bf16.mxu0 0
      %803 = vmatpush1.bf16.msra.mxu0 0
      %804 = vmatprep.subr.bf16.mxu0 0
      %805 = vmatpush1.bf16.msra.mxu0 0
      %806 = vmatprep.subr.bf16.mxu0 0
      %807 = vmatpush1.bf16.msra.mxu0 0
      %808 = vmatprep.mubr.bf16.mxu0 0
      %809 = vmatmul.mubr.bf16.gmra.mrb[0].mxu0 %v334
      %v810 = vpop.f32.mrb[0].mxu0
      %v811 = vadd.f32 0.0, %v810
      %v812 = vpop.f32.mrb[0].mxu0
      %v813 = vpop.f32.mrb[0].mxu0
      %v814 = vadd.f32 0.0, %v813
      %v815 = vpop.f32.mrb[0].mxu0
      %816 = vmatprep.mubr.bf16.mxu0 0
      %817 = vmatmul.mubr.bf16.gmra.mrb[0].mxu0 %v337
      %v818 = vpop.f32.mrb[0].mxu0
      %v819 = vadd.f32 0.0, %v818
      %v820 = vpop.f32.mrb[0].mxu0
      %v821 = vpop.f32.mrb[0].mxu0
      %v822 = vadd.f32 0.0, %v821
      %v823 = vpop.f32.mrb[0].mxu0
      %824 = vmatprep.mubr.bf16.mxu0 0
      %825 = vmatmul.mubr.bf16.gmra.mrb[0].mxu0 %v340
      %v826 = vpop.f32.mrb[0].mxu0
      %v827 = vadd.f32 0.0, %v826
      %v828 = vpop.f32.mrb[0].mxu0
      %v829 = vpop.f32.mrb[0].mxu0
      %v830 = vadd.f32 0.0, %v829
      %v831 = vpop.f32.mrb[0].mxu0
      %832 = vmatprep.mubr.bf16.mxu0 0
      %833 = vmatmul.mubr.bf16.gmra.mrb[0].mxu0 %v343
      %v834 = vpop.f32.mrb[0].mxu0
      %v835 = vadd.f32 0.0, %v834
      %v836 = vpop.f32.mrb[0].mxu0
      %v837 = vpop.f32.mrb[0].mxu0
      %v838 = vadd.f32 0.0, %v837
      %v839 = vpop.f32.mrb[0].mxu0
      %840 = vmatprep.mubr.bf16.mxu0 0
      %841 = vmatmul.mubr.bf16.gmra.mrb[0].mxu0 %v346
      %v842 = vpop.f32.mrb[0].mxu0
      %v843 = vadd.f32 0.0, %v842
      %v844 = vpop.f32.mrb[0].mxu0
      %v845 = vpop.f32.mrb[0].mxu0
      %v846 = vadd.f32 0.0, %v845
      %v847 = vpop.f32.mrb[0].mxu0
      %848 = vmatprep.mubr.bf16.mxu0 0
      %849 = vmatmul.mubr.bf16.gmra.mrb[0].mxu0 %v349
      %v850 = vpop.f32.mrb[0].mxu0
      %v851 = vadd.f32 0.0, %v850
      %v852 = vpop.f32.mrb[0].mxu0
      %v853 = vpop.f32.mrb[0].mxu0
      %v854 = vadd.f32 0.0, %v853
      %v855 = vpop.f32.mrb[0].mxu0
      %856 = vmatprep.mubr.bf16.mxu0 0
      %857 = vmatmul.mubr.bf16.gmra.mrb[0].mxu0 %v352
      %v858 = vpop.f32.mrb[0].mxu0
      %v859 = vadd.f32 0.0, %v858
      %v860 = vpop.f32.mrb[0].mxu0
      %v861 = vpop.f32.mrb[0].mxu0
      %v862 = vadd.f32 0.0, %v861
      %v863 = vpop.f32.mrb[0].mxu0
      %864 = vmatprep.mubr.bf16.mxu0 0
      %865 = vmatmul.mubr.bf16.gmra.mrb[0].mxu0 %v355
      %v866 = vpop.f32.mrb[0].mxu0
      %v867 = vadd.f32 0.0, %v866
      %v868 = vpop.f32.mrb[0].mxu0
      %v869 = vpop.f32.mrb[0].mxu0
      %v870 = vadd.f32 0.0, %v869
      %v871 = vpop.f32.mrb[0].mxu0
      %872 = vdwg.mxu0
      %v873 = vrot.slane %v811, 3
      %v874 = vrot.slane %v814, 3
      %v875 = vrot.slane %v819, 3
      %v876 = vrot.slane %v822, 3
      %v877 = vrot.slane %v827, 3
      %v878 = vrot.slane %v830, 3
      %v879 = vrot.slane %v835, 3
      %v880 = vrot.slane %v838, 3
      %v881 = vrot.slane %v843, 3
      %v882 = vrot.slane %v846, 3
      %v883 = vrot.slane %v851, 3
      %v884 = vrot.slane %v854, 3
      %v885 = vrot.slane %v859, 3
      %v886 = vrot.slane %v862, 3
      %v887 = vrot.slane %v867, 3
      %v888 = vrot.slane %v870, 3
      %vm889 = vcmp.lt.s32.totalorder %v471, 5
      %v890 = vsel %vm889, %v887, %v888
      %v891 = vsel %vm889, %v886, %v887
      %v892 = vsel %vm889, %v885, %v886
      %v893 = vsel %vm889, %v884, %v885
      %v894 = vsel %vm889, %v883, %v884
      %v895 = vsel %vm889, %v882, %v883
      %v896 = vsel %vm889, %v881, %v882
      %v897 = vsel %vm889, %v880, %v881
      %v898 = vsel %vm889, %v879, %v880
      %v899 = vsel %vm889, %v878, %v879
      %v900 = vsel %vm889, %v877, %v878
      %v901 = vsel %vm889, %v876, %v877
      %v902 = vsel %vm889, %v875, %v876
      %v903 = vsel %vm889, %v874, %v875
      %v904 = vsel %vm889, %v873, %v874
      %v905 = vsel %vm889, %v888, %v873
      %v906 = vadd.f32 %v744, %v904
      %v907 = vadd.f32 %v745, %v903
      %v908 = vadd.f32 %v746, %v902
      %v909 = vadd.f32 %v747, %v901
      %v910 = vadd.f32 %v748, %v900
      %v911 = vadd.f32 %v749, %v899
      %v912 = vadd.f32 %v750, %v898
      %v913 = vadd.f32 %v751, %v897
      %v914 = vadd.f32 %v752, %v896
      %v915 = vadd.f32 %v753, %v895
      %v916 = vadd.f32 %v754, %v894
      %v917 = vadd.f32 %v755, %v893
      %v918 = vadd.f32 %v756, %v892
      %v919 = vadd.f32 %v757, %v891
      %v920 = vadd.f32 %v758, %v890
      %v921 = vadd.f32 %v759, %v905
      %v922 = vld [vmem:[%s1 + $0x40] sm:$0xf]
      %v923 = vld [vmem:[%s1 + $0x44] sm:$0xf]
      %v924 = vld [vmem:[%s1 + $0x48] sm:$0xf]
      %v925 = vld [vmem:[%s1 + $0x4c] sm:$0xf]
      %v930 = vunpack.c.l.b16 %v922
      %v931 = vunpack.c.l.b16 %v923
      %v932 = vunpack.c.l.b16 %v924
      %v933 = vunpack.c.l.b16 %v925
      %v934 = vpack.c.b16 %v931, %v930
      %v935 = vpack.c.b16 %v933, %v932
      %938 = vmatprep.subr.bf16.mxu0 0
      %939 = vmatpush1.bf16.msra.mxu0 %v934
      %940 = vmatprep.subr.bf16.mxu0 0
      %941 = vmatpush1.bf16.msra.mxu0 %v935
      %942 = vmatprep.subr.bf16.mxu0 0
      %943 = vmatpush1.bf16.msra.mxu0 0
      %944 = vmatprep.subr.bf16.mxu0 0
      %945 = vmatpush1.bf16.msra.mxu0 0
      %946 = vmatprep.subr.bf16.mxu0 0
      %947 = vmatpush1.bf16.msra.mxu0 0
      %948 = vmatprep.subr.bf16.mxu0 0
      %949 = vmatpush1.bf16.msra.mxu0 0
      %950 = vmatprep.subr.bf16.mxu0 0
      %951 = vmatpush1.bf16.msra.mxu0 0
      %952 = vmatprep.subr.bf16.mxu0 0
      %953 = vmatpush1.bf16.msra.mxu0 0
      %954 = vmatprep.subr.bf16.mxu0 0
      %955 = vmatpush1.bf16.msra.mxu0 0
      %956 = vmatprep.subr.bf16.mxu0 0
      %957 = vmatpush1.bf16.msra.mxu0 0
      %958 = vmatprep.subr.bf16.mxu0 0
      %959 = vmatpush1.bf16.msra.mxu0 0
      %960 = vmatprep.subr.bf16.mxu0 0
      %961 = vmatpush1.bf16.msra.mxu0 0
      %962 = vmatprep.subr.bf16.mxu0 0
      %963 = vmatpush1.bf16.msra.mxu0 0
      %964 = vmatprep.subr.bf16.mxu0 0
      %965 = vmatpush1.bf16.msra.mxu0 0
      %966 = vmatprep.subr.bf16.mxu0 0
      %967 = vmatpush1.bf16.msra.mxu0 0
      %968 = vmatprep.subr.bf16.mxu0 0
      %969 = vmatpush1.bf16.msra.mxu0 0
      %970 = vmatprep.mubr.bf16.mxu0 0
      %971 = vmatmul.mubr.bf16.gmra.mrb[0].mxu0 %v334
      %v972 = vpop.f32.mrb[0].mxu0
      %v973 = vadd.f32 0.0, %v972
      %v974 = vpop.f32.mrb[0].mxu0
      %v975 = vpop.f32.mrb[0].mxu0
      %v976 = vadd.f32 0.0, %v975
      %v977 = vpop.f32.mrb[0].mxu0
      %978 = vmatprep.mubr.bf16.mxu0 0
      %979 = vmatmul.mubr.bf16.gmra.mrb[0].mxu0 %v337
      %v980 = vpop.f32.mrb[0].mxu0
      %v981 = vadd.f32 0.0, %v980
      %v982 = vpop.f32.mrb[0].mxu0
      %v983 = vpop.f32.mrb[0].mxu0
      %v984 = vadd.f32 0.0, %v983
      %v985 = vpop.f32.mrb[0].mxu0
      %986 = vmatprep.mubr.bf16.mxu0 0
      %987 = vmatmul.mubr.bf16.gmra.mrb[0].mxu0 %v340
      %v988 = vpop.f32.mrb[0].mxu0
      %v989 = vadd.f32 0.0, %v988
      %v990 = vpop.f32.mrb[0].mxu0
      %v991 = vpop.f32.mrb[0].mxu0
      %v992 = vadd.f32 0.0, %v991
      %v993 = vpop.f32.mrb[0].mxu0
      %994 = vmatprep.mubr.bf16.mxu0 0
      %995 = vmatmul.mubr.bf16.gmra.mrb[0].mxu0 %v343
      %v996 = vpop.f32.mrb[0].mxu0
      %v997 = vadd.f32 0.0, %v996
      %v998 = vpop.f32.mrb[0].mxu0
      %v999 = vpop.f32.mrb[0].mxu0
      %v1000 = vadd.f32 0.0, %v999
      %v1001 = vpop.f32.mrb[0].mxu0
      %1002 = vmatprep.mubr.bf16.mxu0 0
      %1003 = vmatmul.mubr.bf16.gmra.mrb[0].mxu0 %v346
      %v1004 = vpop.f32.mrb[0].mxu0
      %v1005 = vadd.f32 0.0, %v1004
      %v1006 = vpop.f32.mrb[0].mxu0
      %v1007 = vpop.f32.mrb[0].mxu0
      %v1008 = vadd.f32 0.0, %v1007
      %v1009 = vpop.f32.mrb[0].mxu0
      %1010 = vmatprep.mubr.bf16.mxu0 0
      %1011 = vmatmul.mubr.bf16.gmra.mrb[0].mxu0 %v349
      %v1012 = vpop.f32.mrb[0].mxu0
      %v1013 = vadd.f32 0.0, %v1012
      %v1014 = vpop.f32.mrb[0].mxu0
      %v1015 = vpop.f32.mrb[0].mxu0
      %v1016 = vadd.f32 0.0, %v1015
      %v1017 = vpop.f32.mrb[0].mxu0
      %1018 = vmatprep.mubr.bf16.mxu0 0
      %1019 = vmatmul.mubr.bf16.gmra.mrb[0].mxu0 %v352
      %v1020 = vpop.f32.mrb[0].mxu0
      %v1021 = vadd.f32 0.0, %v1020
      %v1022 = vpop.f32.mrb[0].mxu0
      %v1023 = vpop.f32.mrb[0].mxu0
      %v1024 = vadd.f32 0.0, %v1023
      %v1025 = vpop.f32.mrb[0].mxu0
      %1026 = vmatprep.mubr.bf16.mxu0 0
      %1027 = vmatmul.mubr.bf16.gmra.mrb[0].mxu0 %v355
      %v1028 = vpop.f32.mrb[0].mxu0
      %v1029 = vadd.f32 0.0, %v1028
      %v1030 = vpop.f32.mrb[0].mxu0
      %v1031 = vpop.f32.mrb[0].mxu0
      %v1032 = vadd.f32 0.0, %v1031
      %v1033 = vpop.f32.mrb[0].mxu0
      %1034 = vdwg.mxu0
      %v1035 = vrot.slane %v973, 4
      %v1036 = vrot.slane %v976, 4
      %v1037 = vrot.slane %v981, 4
      %v1038 = vrot.slane %v984, 4
      %v1039 = vrot.slane %v989, 4
      %v1040 = vrot.slane %v992, 4
      %v1041 = vrot.slane %v997, 4
      %v1042 = vrot.slane %v1000, 4
      %v1043 = vrot.slane %v1005, 4
      %v1044 = vrot.slane %v1008, 4
      %v1045 = vrot.slane %v1013, 4
      %v1046 = vrot.slane %v1016, 4
      %v1047 = vrot.slane %v1021, 4
      %v1048 = vrot.slane %v1024, 4
      %v1049 = vrot.slane %v1029, 4
      %v1050 = vrot.slane %v1032, 4
      %vm1051 = vcmp.lt.s32.totalorder %v471, 4
      %v1052 = vsel %vm1051, %v1049, %v1050
      %v1053 = vsel %vm1051, %v1048, %v1049
      %v1054 = vsel %vm1051, %v1047, %v1048
      %v1055 = vsel %vm1051, %v1046, %v1047
      %v1056 = vsel %vm1051, %v1045, %v1046
      %v1057 = vsel %vm1051, %v1044, %v1045
      %v1058 = vsel %vm1051, %v1043, %v1044
      %v1059 = vsel %vm1051, %v1042, %v1043
      %v1060 = vsel %vm1051, %v1041, %v1042
      %v1061 = vsel %vm1051, %v1040, %v1041
      %v1062 = vsel %vm1051, %v1039, %v1040
      %v1063 = vsel %vm1051, %v1038, %v1039
      %v1064 = vsel %vm1051, %v1037, %v1038
      %v1065 = vsel %vm1051, %v1036, %v1037
      %v1066 = vsel %vm1051, %v1035, %v1036
      %v1067 = vsel %vm1051, %v1050, %v1035
      %v1068 = vadd.f32 %v906, %v1066
      %v1069 = vadd.f32 %v907, %v1065
      %v1070 = vadd.f32 %v908, %v1064
      %v1071 = vadd.f32 %v909, %v1063
      %v1072 = vadd.f32 %v910, %v1062
      %v1073 = vadd.f32 %v911, %v1061
      %v1074 = vadd.f32 %v912, %v1060
      %v1075 = vadd.f32 %v913, %v1059
      %v1076 = vadd.f32 %v914, %v1058
      %v1077 = vadd.f32 %v915, %v1057
      %v1078 = vadd.f32 %v916, %v1056
      %v1079 = vadd.f32 %v917, %v1055
      %v1080 = vadd.f32 %v918, %v1054
      %v1081 = vadd.f32 %v919, %v1053
      %v1082 = vadd.f32 %v920, %v1052
      %v1083 = vadd.f32 %v921, %v1067
      %v1084 = vld [vmem:[%s2] sm:$0x1]
      %v1086 = vlaneseq
      %v1087 = vshrl.u32 %v1086, 7
      %v1088 = vsub.s32 0, %v1087
      %v1089 = vrot.slane %v1084, %v1088
      %v1091 = vadd.f32 %v1068, %v1089
      %v1092 = vadd.f32 %v1069, %v1089
      %v1093 = vadd.f32 %v1070, %v1089
      %v1094 = vadd.f32 %v1071, %v1089
      %v1095 = vadd.f32 %v1072, %v1089
      %v1096 = vadd.f32 %v1073, %v1089
      %v1097 = vadd.f32 %v1074, %v1089
      %v1098 = vadd.f32 %v1075, %v1089
      %v1099 = vadd.f32 %v1076, %v1089
      %v1100 = vadd.f32 %v1077, %v1089
      %v1101 = vadd.f32 %v1078, %v1089
      %v1102 = vadd.f32 %v1079, %v1089
      %v1103 = vadd.f32 %v1080, %v1089
      %v1104 = vadd.f32 %v1081, %v1089
      %v1105 = vadd.f32 %v1082, %v1089
      %v1106 = vadd.f32 %v1083, %v1089
      %v1107 = vmax.f32 %v1091, 0.0
      %v1108 = vmax.f32 %v1092, 0.0
      %v1109 = vmax.f32 %v1093, 0.0
      %v1110 = vmax.f32 %v1094, 0.0
      %v1111 = vmax.f32 %v1095, 0.0
      %v1112 = vmax.f32 %v1096, 0.0
      %v1113 = vmax.f32 %v1097, 0.0
      %v1114 = vmax.f32 %v1098, 0.0
      %v1115 = vmax.f32 %v1099, 0.0
      %v1116 = vmax.f32 %v1100, 0.0
      %v1117 = vmax.f32 %v1101, 0.0
      %v1118 = vmax.f32 %v1102, 0.0
      %v1119 = vmax.f32 %v1103, 0.0
      %v1120 = vmax.f32 %v1104, 0.0
      %v1121 = vmax.f32 %v1105, 0.0
      %v1122 = vmax.f32 %v1106, 0.0
      %v1123 = vld [vmem:[%s3] sm:$0xff]
      %v1124 = vld [vmem:[%s3 + $0x8] sm:$0xff]
      %v1125 = vmul.f32 %v1107, %v1123
      %v1126 = vmul.f32 %v1108, %v1124
      %v1127 = vmul.f32 %v1109, %v1123
      %v1128 = vmul.f32 %v1110, %v1124
      %v1129 = vmul.f32 %v1111, %v1123
      %v1130 = vmul.f32 %v1112, %v1124
      %v1131 = vmul.f32 %v1113, %v1123
      %v1132 = vmul.f32 %v1114, %v1124
      %v1133 = vmul.f32 %v1115, %v1123
      %v1134 = vmul.f32 %v1116, %v1124
      %v1135 = vmul.f32 %v1117, %v1123
      %v1136 = vmul.f32 %v1118, %v1124
      %v1137 = vmul.f32 %v1119, %v1123
      %v1138 = vmul.f32 %v1120, %v1124
      %v1139 = vmul.f32 %v1121, %v1123
      %v1140 = vmul.f32 %v1122, %v1124
      %v1141 = vmax.f32 %v1125, %v1126
      %v1142 = vrot.slane %v1141, 4
      %v1143 = vmax.f32 %v1141, %v1142
      %v1144 = vrot.slane %v1143, 2
      %v1145 = vmax.f32 %v1143, %v1144
      %v1146 = vrot.slane %v1145, 1
      %v1147 = vmax.f32 %v1145, %v1146
      %v1148 = vmax.f32 %v1127, %v1128
      %v1149 = vrot.slane %v1148, 4
      %v1150 = vmax.f32 %v1148, %v1149
      %v1151 = vrot.slane %v1150, 2
      %v1152 = vmax.f32 %v1150, %v1151
      %v1153 = vrot.slane %v1152, 1
      %v1154 = vmax.f32 %v1152, %v1153
      %v1155 = vmax.f32 %v1129, %v1130
      %v1156 = vrot.slane %v1155, 4
      %v1157 = vmax.f32 %v1155, %v1156
      %v1158 = vrot.slane %v1157, 2
      %v1159 = vmax.f32 %v1157, %v1158
      %v1160 = vrot.slane %v1159, 1
      %v1161 = vmax.f32 %v1159, %v1160
      %v1162 = vmax.f32 %v1131, %v1132
      %v1163 = vrot.slane %v1162, 4
      %v1164 = vmax.f32 %v1162, %v1163
      %v1165 = vrot.slane %v1164, 2
      %v1166 = vmax.f32 %v1164, %v1165
      %v1167 = vrot.slane %v1166, 1
      %v1168 = vmax.f32 %v1166, %v1167
      %v1169 = vmax.f32 %v1133, %v1134
      %v1170 = vrot.slane %v1169, 4
      %v1171 = vmax.f32 %v1169, %v1170
      %v1172 = vrot.slane %v1171, 2
      %v1173 = vmax.f32 %v1171, %v1172
      %v1174 = vrot.slane %v1173, 1
      %v1175 = vmax.f32 %v1173, %v1174
      %v1176 = vmax.f32 %v1135, %v1136
      %v1177 = vrot.slane %v1176, 4
      %v1178 = vmax.f32 %v1176, %v1177
      %v1179 = vrot.slane %v1178, 2
      %v1180 = vmax.f32 %v1178, %v1179
      %v1181 = vrot.slane %v1180, 1
      %v1182 = vmax.f32 %v1180, %v1181
      %v1183 = vmax.f32 %v1137, %v1138
      %v1184 = vrot.slane %v1183, 4
      %v1185 = vmax.f32 %v1183, %v1184
      %v1186 = vrot.slane %v1185, 2
      %v1187 = vmax.f32 %v1185, %v1186
      %v1188 = vrot.slane %v1187, 1
      %v1189 = vmax.f32 %v1187, %v1188
      %v1190 = vmax.f32 %v1139, %v1140
      %v1191 = vrot.slane %v1190, 4
      %v1192 = vmax.f32 %v1190, %v1191
      %v1193 = vrot.slane %v1192, 2
      %v1194 = vmax.f32 %v1192, %v1193
      %v1195 = vrot.slane %v1194, 1
      %v1196 = vmax.f32 %v1194, %v1195
      %v1197 = vld [vmem:[%s4] sm:$0xff]
      %v1198 = vld [vmem:[%s4 + $0x8] sm:$0xff]
      %v1199 = vld [vmem:[%s4 + $0x10] sm:$0xff]
      %v1200 = vld [vmem:[%s4 + $0x18] sm:$0xff]
      %v1201 = vld [vmem:[%s4 + $0x20] sm:$0xff]
      %v1202 = vld [vmem:[%s4 + $0x28] sm:$0xff]
      %v1203 = vld [vmem:[%s4 + $0x30] sm:$0xff]
      %v1204 = vld [vmem:[%s4 + $0x38] sm:$0xff]
      %v1205 = vld [vmem:[%s4 + $0x40] sm:$0xff]
      %v1206 = vld [vmem:[%s4 + $0x48] sm:$0xff]
      %v1207 = vld [vmem:[%s4 + $0x50] sm:$0xff]
      %v1208 = vld [vmem:[%s4 + $0x58] sm:$0xff]
      %v1209 = vld [vmem:[%s4 + $0x60] sm:$0xff]
      %v1210 = vld [vmem:[%s4 + $0x68] sm:$0xff]
      %v1211 = vld [vmem:[%s4 + $0x70] sm:$0xff]
      %v1212 = vld [vmem:[%s4 + $0x78] sm:$0xff]
      %v1213 = vld [vmem:[%s5] sm:$0x1]
      %v1215 = vlaneseq
      %v1216 = vshrl.u32 %v1215, 7
      %v1217 = vsub.s32 0, %v1216
      %v1218 = vrot.slane %v1213, %v1217
      %vm1228 = vcmask 1041409
      %v1229 = vsel %vm1228, %v1154, %v1147
      %vm1230 = vcmask 1042434
      %v1231 = vsel %vm1230, %v1161, %v1229
      %vm1232 = vcmask 1043459
      %v1233 = vsel %vm1232, %v1168, %v1231
      %vm1234 = vcmask 1044484
      %v1235 = vsel %vm1234, %v1175, %v1233
      %vm1236 = vcmask 1045509
      %v1237 = vsel %vm1236, %v1182, %v1235
      %vm1238 = vcmask 1046534
      %v1239 = vsel %vm1238, %v1189, %v1237
      %vm1240 = vcmask 1047559
      %v1241 = vsel %vm1240, %v1196, %v1239
      %1243 = vmatprep.subr.mxu0 0.0
      %1244 = vmatpush1.msra.mxu0 %v1197
      %1245 = vmatprep.subr.mxu0 0.0
      %1246 = vmatpush1.msra.mxu0 %v1198
      %1247 = vmatprep.subr.mxu0 0.0
      %1248 = vmatpush1.msra.mxu0 %v1199
      %1249 = vmatprep.subr.mxu0 0.0
      %1250 = vmatpush1.msra.mxu0 %v1200
      %1251 = vmatprep.subr.mxu0 0.0
      %1252 = vmatpush1.msra.mxu0 %v1201
      %1253 = vmatprep.subr.mxu0 0.0
      %1254 = vmatpush1.msra.mxu0 %v1202
      %1255 = vmatprep.subr.mxu0 0.0
      %1256 = vmatpush1.msra.mxu0 %v1203
      %1257 = vmatprep.subr.mxu0 0.0
      %1258 = vmatpush1.msra.mxu0 %v1204
      %1259 = vmatprep.subr.mxu0 0.0
      %1260 = vmatpush1.msra.mxu0 %v1205
      %1261 = vmatprep.subr.mxu0 0.0
      %1262 = vmatpush1.msra.mxu0 %v1206
      %1263 = vmatprep.subr.mxu0 0.0
      %1264 = vmatpush1.msra.mxu0 %v1207
      %1265 = vmatprep.subr.mxu0 0.0
      %1266 = vmatpush1.msra.mxu0 %v1208
      %1267 = vmatprep.subr.mxu0 0.0
      %1268 = vmatpush1.msra.mxu0 %v1209
      %1269 = vmatprep.subr.mxu0 0.0
      %1270 = vmatpush1.msra.mxu0 %v1210
      %1271 = vmatprep.subr.mxu0 0.0
      %1272 = vmatpush1.msra.mxu0 %v1211
      %1273 = vmatprep.subr.mxu0 0.0
      %1274 = vmatpush1.msra.mxu0 %v1212
      %1275 = vmatprep.subr.mxu0 0.0
      %1276 = vmatpush1.msra.mxu0 0.0
      %1277 = vmatprep.subr.mxu0 0.0
      %1278 = vmatpush1.msra.mxu0 0.0
      %1279 = vmatprep.subr.mxu0 0.0
      %1280 = vmatpush1.msra.mxu0 0.0
      %1281 = vmatprep.subr.mxu0 0.0
      %1282 = vmatpush1.msra.mxu0 0.0
      %1283 = vmatprep.subr.mxu0 0.0
      %1284 = vmatpush1.msra.mxu0 0.0
      %1285 = vmatprep.subr.mxu0 0.0
      %1286 = vmatpush1.msra.mxu0 0.0
      %1287 = vmatprep.subr.mxu0 0.0
      %1288 = vmatpush1.msra.mxu0 0.0
      %1289 = vmatprep.subr.mxu0 0.0
      %1290 = vmatpush1.msra.mxu0 0.0
      %1291 = vmatprep.subr.mxu0 0.0
      %1292 = vmatpush1.msra.mxu0 0.0
      %1293 = vmatprep.subr.mxu0 0.0
      %1294 = vmatpush1.msra.mxu0 0.0
      %1295 = vmatprep.subr.mxu0 0.0
      %1296 = vmatpush1.msra.mxu0 0.0
      %1297 = vmatprep.subr.mxu0 0.0
      %1298 = vmatpush1.msra.mxu0 0.0
      %1299 = vmatprep.subr.mxu0 0.0
      %1300 = vmatpush1.msra.mxu0 0.0
      %1301 = vmatprep.subr.mxu0 0.0
      %1302 = vmatpush1.msra.mxu0 0.0
      %1303 = vmatprep.subr.mxu0 0.0
      %1304 = vmatpush1.msra.mxu0 0.0
      %1305 = vmatprep.subr.mxu0 0.0
      %1306 = vmatpush1.msra.mxu0 0.0
      %1307 = vmatprep.mubr.f32.mxu0 0.0
      %1308 = vmatmul.mubr.f32.gmra.mrb[0].mxu0 %v1241
      %v1309 = vpop.f32.mrb[0].mxu0
      %v1310 = vadd.f32 %v1218, %v1309
      %v1311 = vpop.f32.mrb[0].mxu0
      %1312 = vdwg.mxu0
      %1313 = vst [vmem:[%s254] sm:$0xff] %v1310
      %p1314 = scmp.lt.s32.totalorder %s17, 3
      %s1315 = scalar_select %p1314, %s17, 3
      %s1316 = smul.addr %s1315, 8
      %s1317 = scalar_lea.vmem %s6, %s1316
      // Predicated region
      $region45: #{cnn_text_forward.1} parent=43 // pred_check
        %p1318 = pneg %p166
      $region46: #{cnn_text_forward.1} parent=43 // pred_check_branch
        %1320 = sbr.rel (%p1318) target = $region48
      $region47: #{cnn_text_forward.1} parent=43 // pred_region
        _
      $region48: #{cnn_text_forward.1} parent=43 // pred_fallthru
        _
    $region44: #{cnn_text_forward.1} parent=5 // pred_fallthru
      _
    %p1321 = scmp.le.s32.totalorder 2, %s12
    // Predicated region
    $region49: #{cnn_text_forward.1} parent=5 // pred_check
      %p1322 = pneg %p1321
    $region50: #{cnn_text_forward.1} parent=5 // pred_check_branch
      %1324 = sbr.rel (%p1322) target = $region52
    $region51: #{cnn_text_forward.1} parent=5 // pred_region
      %s1325 = ssub.s32 %s12, 2
      // Predicated region
      $region53: #{cnn_text_forward.1} parent=51 // pred_check
        %p1326 = pneg %p172
      $region54: #{cnn_text_forward.1} parent=51 // pred_check_branch
        %1328 = sbr.rel (%p1326) target = $region56
      $region55: #{cnn_text_forward.1} parent=51 // pred_region
        %p1329 = scmp.lt.s32.totalorder %s18, 3
        %s1330 = scalar_select %p1329, %s18, 3
        %s1331 = smul.addr %s1330, 8
        %s1332 = scalar_lea.vmem %s6, %s1331
      $region56: #{cnn_text_forward.1} parent=51 // pred_fallthru
        _
    $region52: #{cnn_text_forward.1} parent=5 // pred_fallthru
      _
  $region6: #{cnn_text_forward.1} parent=0 // loop_footer
    %s16 = sadd.s32 1, %s12
  $region7: #{cnn_text_forward.1} parent=0 // loop_footer_branch
    %11 = sbr.rel target = $region3
  $region8: #{cnn_text_forward.1} parent=0 // loop_exit
    _

</llo_original>
